<compile_context>
chip_gen: v7x
topology: tpu7x:2x2x1
jax: 0.10.0
libtpu: 0.0.40
codegen_flags: <defaults>
</compile_context>

<pallas_src>
import jax
import jax.numpy as jnp
from jax.experimental import pallas as pl
from jax.experimental.pallas import tpu as pltpu


def _conv1x1_kernel(x_ref, w_ref, b_ref, o_ref):
    # x_ref: (bn, C_in, tn)   pixel slab (channels on sublanes, pixels on lanes)
    # w_ref: (C_out, C_in)    resident weight
    # b_ref: (C_out, 1)       resident bias
    # o_ref: (bn, C_out, tn)  output slab
    w = w_ref[...]
    bias = b_ref[...].astype(jnp.float32)          # (C_out, 1), broadcasts over lanes
    bn = x_ref.shape[0]                            # static block shape
    for i in range(bn):                            # short unrolled per-batch matmul
        acc = jnp.dot(w, x_ref[i], preferred_element_type=jnp.float32)
        o_ref[i] = (acc + bias).astype(o_ref.dtype)


def _vmem_budgets():
    """(double-buffered block budget, vmem_limit_bytes), gated on VMEM capacity."""
    cap = 64 * 1024 * 1024                         # conservative default (v7x-sized)
    try:
        info = pltpu.get_tpu_info()
        c = getattr(info, "vmem_capacity_bytes", None)
        if c:
            cap = int(c)
    except Exception:
        pass
    if cap >= 128 * 1024 * 1024:                   # v5e / v6e: 128 MiB physical
        return 20 * 1024 * 1024, 64 * 1024 * 1024
    return 10 * 1024 * 1024, 40 * 1024 * 1024      # v7x-class (64 MiB) or unknown


def _choose_tiles(n_batch, hw, c_in, c_out, dtype_bytes, block_budget):
    """Pick (bn, tn): batches per grid step and lane (pixel) tile.

    tn is the full H*W extent (layout-legal for any HW, contiguous per-batch
    DMA) when double-buffered in+out blocks fit the budget, otherwise the
    largest multiple of 128 that fits.  bn grows until the per-step HBM slab
    is ~2 MiB (amortizing per-step overhead) subject to the VMEM budget and a
    small unroll cap.  Then prefer >= 8 total grid steps and an even count so
    both v7x TensorCores get balanced, pipelinable work.
    """
    sub = {4: 8, 2: 16, 1: 32}.get(dtype_bytes, 8)
    cin_p = -(-c_in // sub) * sub
    cout_p = -(-c_out // sub) * sub
    vmem_per_pixel = 2 * (cin_p + cout_p) * dtype_bytes   # double-buffered in+out
    hbm_per_pixel = (c_in + c_out) * dtype_bytes          # actual HBM traffic

    # Lane (pixel) tile.
    if hw <= 128 or hw * vmem_per_pixel <= block_budget:
        tn = hw                                    # full extent (always layout-legal)
    else:
        tn = max(128, (block_budget // vmem_per_pixel // 128) * 128)
        tn = min(tn, (hw // 128) * 128)

    # Batches per step: target ~2 MiB of HBM traffic per grid step.
    target = 2 * 1024 * 1024
    bn = max(1, min(n_batch,
                    16,                                            # kernel unroll cap
                    target // max(1, hbm_per_pixel * tn),
                    block_budget // max(1, vmem_per_pixel * tn)))

    # Megacore / pipelining guard: prefer >= 8 grid steps and an even count.
    steps = lambda b, t: (-(-n_batch // b)) * (-(-hw // t))
    while steps(bn, tn) < 8 and bn > 1:
        bn = max(1, bn // 2)
    while steps(bn, tn) < 8 and tn > 128:
        tn = max(128, (tn // 2 // 128) * 128)
    total = steps(bn, tn)
    while total > 1 and total % 2 == 1 and bn > 1:
        bn -= 1
        total = steps(bn, tn)
    return bn, tn


def conv1x1_pallas(x_nchw, weight, bias):
    """1x1 conv (FeatureMapBlock.forward).

    x_nchw: (N, C_in, H, W); weight: (C_out, C_in, 1, 1); bias: (C_out,).
    Returns (N, C_out, H, W).
    """
    N, C_in, H, W = x_nchw.shape
    C_out = weight.shape[0]
    HW = H * W

    x3 = x_nchw.reshape(N, C_in, HW)               # free reshape (contiguous NCHW)
    w2d = weight.reshape(C_out, C_in)
    b2d = bias.reshape(C_out, 1)

    dtype_bytes = jnp.dtype(x_nchw.dtype).itemsize
    block_budget, vmem_limit = _vmem_budgets()

    # Reserve VMEM for the resident weight/bias blocks (lane-padded to 128,
    # sublane-padded, x2 for the pipeline's buffering).
    # TODO(synk): very large C_in*C_out would need a channel-tiled ("arbitrary")
    # K grid axis with an f32 accumulator instead of a fully resident weight.
    sub = {4: 8, 2: 16, 1: 32}.get(dtype_bytes, 8)
    w_vmem = (-(-C_out // sub) * sub) * max(128, -(-C_in // 128) * 128) * dtype_bytes
    b_vmem = (-(-C_out // sub) * sub) * 128 * dtype_bytes
    block_budget = max(1 << 20, block_budget - 2 * (w_vmem + b_vmem))

    bn, tn = _choose_tiles(N, HW, C_in, C_out, dtype_bytes, block_budget)
    grid = (pl.cdiv(N, bn), pl.cdiv(HW, tn))

    cost = pl.CostEstimate(
        flops=2 * N * HW * C_in * C_out,
        transcendentals=0,
        bytes_accessed=(N * HW * (C_in + C_out) + C_out * (C_in + 1)) * dtype_bytes,
    )

    out3 = pl.pallas_call(
        _conv1x1_kernel,
        out_shape=jax.ShapeDtypeStruct((N, C_out, HW), x_nchw.dtype),
        grid_spec=pltpu.PrefetchScalarGridSpec(
            num_scalar_prefetch=0,
            grid=grid,
            in_specs=[
                # batch slab x channels (sublanes) x pixels (lanes)
                pl.BlockSpec((bn, C_in, tn), lambda b, j: (b, 0, j)),
                pl.BlockSpec((C_out, C_in), lambda b, j: (0, 0)),
                pl.BlockSpec((C_out, 1), lambda b, j: (0, 0)),
            ],
            out_specs=pl.BlockSpec((bn, C_out, tn), lambda b, j: (b, 0, j)),
        ),
        compiler_params=pltpu.CompilerParams(
            dimension_semantics=("parallel", "parallel"),
            vmem_limit_bytes=vmem_limit,
        ),
        cost_estimate=cost,
    )(x3, w2d, b2d)

    return out3.reshape(N, C_out, H, W)


if __name__ == "__main__":
    # FeatureMapBlock(input_channels=4, output_channels=8) at small shapes.
    N, C_in, H, W = 2, 4, 16, 16
    C_out = 8

    key = jax.random.PRNGKey(0)
    kx, kw, kb = jax.random.split(key, 3)

    x = jax.random.normal(kx, (N, C_in, H, W), dtype=jnp.float32)
    # Conv2d(C_in, C_out, kernel_size=1) parameter shapes.
    weight = jax.random.normal(kw, (C_out, C_in, 1, 1), dtype=jnp.float32) * 0.1
    bias = jax.random.normal(kb, (C_out,), dtype=jnp.float32) * 0.1

    out = conv1x1_pallas(x, weight, bias)
    out = jax.block_until_ready(out)

    # Reference: plain-JAX 1x1 conv (channel matmul + bias).
    ref = jnp.einsum("nchw,oc->nohw", x, weight.reshape(C_out, C_in)) + bias[None, :, None, None]
    assert out.shape == (N, C_out, H, W)
    assert jnp.allclose(out, ref, atol=1e-5, rtol=1e-5), "mismatch vs reference"

    print("KERNEL_OK")
</pallas_src>

<mosaic_0001>
module attributes {stable_mosaic.version = 11 : i64} {
  func.func @_conv1x1_kernel(%arg0: i32, %arg1: i32, %arg2: memref<1x4x128xf32, #tpu.memory_space<vmem>>, %arg3: memref<8x4xf32, #tpu.memory_space<vmem>>, %arg4: memref<8x1xf32, #tpu.memory_space<vmem>>, %arg5: memref<1x8x128xf32, #tpu.memory_space<vmem>>) attributes {dimension_semantics = [#tpu.dimension_semantics<parallel>, #tpu.dimension_semantics<parallel>], iteration_bounds = array<i64: 2, 2>, scalar_prefetch = 0 : i64, scratch_operands = 0 : i64, tpu.core_type = #tpu.core_type<tc>, window_params = [{transform_indices = @transform_0, window_bounds = array<i64: 1, 4, 128>}, {pipeline_mode = #tpu.pipeline_mode<synchronous>, transform_indices = @transform_1, window_bounds = array<i64: 8, 4>}, {pipeline_mode = #tpu.pipeline_mode<synchronous>, transform_indices = @transform_2, window_bounds = array<i64: 8, 1>}, {transform_indices = @transform_3, window_bounds = array<i64: 1, 8, 128>}]} {
    %c0 = arith.constant 0 : index
    %c0_0 = arith.constant 0 : index
    %0 = vector.load %arg3[%c0, %c0_0] : memref<8x4xf32, #tpu.memory_space<vmem>>, vector<8x4xf32>
    %c0_1 = arith.constant 0 : index
    %c0_2 = arith.constant 0 : index
    %1 = vector.load %arg4[%c0_1, %c0_2] : memref<8x1xf32, #tpu.memory_space<vmem>>, vector<8x1xf32>
    %c0_3 = arith.constant 0 : index
    %c0_4 = arith.constant 0 : index
    %c0_5 = arith.constant 0 : index
    %2 = vector.load %arg2[%c0_3, %c0_4, %c0_5] : memref<1x4x128xf32, #tpu.memory_space<vmem>>, vector<1x4x128xf32>
    %3 = vector.shape_cast %2 : vector<1x4x128xf32> to vector<4x128xf32>
    %cst = arith.constant dense<0.000000e+00> : vector<8x128xf32>
    %4 = tpu.matmul %0, %3, %cst {dimension_numbers = #tpu.dot_dimension_numbers<[1], [0], [0], [1], [0, 0, 1, 1], [], []>} : vector<8x4xf32>, vector<4x128xf32>, vector<8x128xf32> -> vector<8x128xf32>
    %5 = vector.broadcast %1 : vector<8x1xf32> to vector<8x128xf32>
    %6 = arith.addf %4, %5 : vector<8x128xf32>
    %c0_6 = arith.constant 0 : index
    %c0_7 = arith.constant 0 : index
    %c0_8 = arith.constant 0 : index
    %7 = vector.load %arg5[%c0_6, %c0_7, %c0_8] : memref<1x8x128xf32, #tpu.memory_space<vmem>>, vector<1x8x128xf32>
    %8 = vector.shape_cast %7 : vector<1x8x128xf32> to vector<8x128xf32>
    %9 = vector.shape_cast %6 : vector<8x128xf32> to vector<1x8x128xf32>
    tpu.vector_store %arg5[%c0_6, %c0_7, %c0_8], %9 {strides = array<i32>} : memref<1x8x128xf32, #tpu.memory_space<vmem>>, vector<1x8x128xf32>,
    return
  }
  func.func @transform_0(%arg0: i32, %arg1: i32) -> (i32, i32, i32) {
    %c0_i32 = arith.constant 0 : i32
    %c0_i32_0 = arith.constant 0 : i32
    return %arg0, %c0_i32, %arg1 : i32, i32, i32
  }
  func.func @transform_1(%arg0: i32, %arg1: i32) -> (i32, i32) {
    %c0_i32 = arith.constant 0 : i32
    %c0_i32_0 = arith.constant 0 : i32
    %c0_i32_1 = arith.constant 0 : i32
    return %c0_i32, %c0_i32_0 : i32, i32
  }
  func.func @transform_2(%arg0: i32, %arg1: i32) -> (i32, i32) {
    %c0_i32 = arith.constant 0 : i32
    %c0_i32_0 = arith.constant 0 : i32
    %c0_i32_1 = arith.constant 0 : i32
    return %c0_i32, %c0_i32_0 : i32, i32
  }
  func.func @transform_3(%arg0: i32, %arg1: i32) -> (i32, i32, i32) {
    %c0_i32 = arith.constant 0 : i32
    %c0_i32_0 = arith.constant 0 : i32
    return %arg0, %c0_i32, %arg1 : i32, i32, i32
  }
}

</mosaic_0001>

<llo_original>
// kernel: tpu_custom_call.1
$region0: #{tpu_custom_call.1}
  #allocation0 [shape = 'u32[]', space=smem, size = 0x4, offset = 0x4, fixed_abs, tag = 'smem constant byte address 0x4 - core index']
  #allocation1 [shape = 'u32[144,128]{1,0:T(1,128)}', space=vmem, size = 0x12000, scoped, tag = 'internal scratch']
  %s0 = inlined_call_operand.vmem [shape: f32[2,4,256], index: 0, kind: input, shape index: {}]
  %s1 = inlined_call_operand.vmem [shape: f32[8,4], index: 1, kind: input, shape index: {}]
  %s2 = inlined_call_operand.vmem [shape: f32[8,1], index: 2, kind: input, shape index: {}]
  %s3 = inlined_call_operand.hbm [shape: f32[2,8,256], index: 3, kind: output, shape index: {}]
  %s4 = sld [smem:[#allocation0]]
  $region45: #{tpu_custom_call.1} parent=0
    _
  %s6 = ssub.s32 1, %s4
  %s7 = scalar_select 0, %s6, %s4
  $region1: #{tpu_custom_call.1} parent=0
    #allocation2 [shape = 'u8[8192]{0}', space=vmem, size = 0x2000, scoped, tag = 'output window, operand 0']
    #allocation3 [shape = 's32[2]{0}', space=sflag, size = 0x8, scoped, tag = 'scoped memory for tpu_custom_call.1']
    %8 = vsyncpa [#allocation3], 0
    %s9 = scalar_lea.sflag [#allocation3], 1
    %10 = vsyncpa %s9, 0
    loop: start=0, step=1, limit=6
    $region2: #{tpu_custom_call.1} parent=1 // loop_pre_header
      _
    $region3: #{tpu_custom_call.1} parent=1 // loop_header
      %s12 = sphi 0, %s16
      %p13 = scmp.ge.s32.totalorder %s12, 6
      %s19 = sphi 0, %s31
      %s20 = sphi 0, %s27
      %s21 = sphi 0, %s19
      %s22 = sphi 0, %s20
      %s23 = sphi 0, %s21
      %s24 = sphi 0, %s22
      %s36 = sphi 0, %s38
      %s39 = sphi 0, %s36
      %s40 = sphi 0, %s39
      %s56 = sphi 0, %s40
      %s60 = sphi 0, %s60
      %s62 = sphi 0, %s60
      %s63 = sphi 0, %s62
      %s77 = sphi 0, %s63
      %s81 = sphi 0, %s81
      %s83 = sphi 0, %s81
      %s84 = sphi 0, %s83
      %s98 = sphi 0, %s84
      %s106 = sphi 0, %s108
      %s109 = sphi 0, %s106
      %s110 = sphi 0, %s109
      %s126 = sphi 0, %s110
    $region4: #{tpu_custom_call.1} parent=1 // loop_header_branch
      %15 = sbr.rel (%p13) target = $region8
    $region5: #{tpu_custom_call.1} parent=1 // loop_body
      %s17 = ssub.s32 %s12, 1
      %s18 = ssub.s32 %s12, 2
      %s25 = sadd.s32 1, %s20
      %p26 = scmp.ge.s32.totalorder %s25, 2
      %s27 = scalar_select %p26, 0, %s25
      %s28 = sadd.s32 1, %s19
      %s29 = scalar_select %p26, %s28, %s19
      %p30 = scmp.ge.s32.totalorder %s29, 2
      %s31 = scalar_select %p30, 0, %s29
      %s32 = ssub.s32 %s19, %s31
      %s33 = ssub.s32 %s20, %s27
      %s34 = sor.u32 %s32, %s33
      %p35 = scmp.eq.s32.totalorder %s34, 0
      %s37 = sadd.s32 %s36, 1
      %s38 = scalar_select %p35, %s36, %s37
      %p41 = pneg %p35
      %p42 = scmp.eq.s32.totalorder %s12, 3
      %p43 = por %p41, %p42
      %p44 = scmp.ne.s32.totalorder %s36, %s39
      %p45 = scmp.eq.s32.totalorder %s12, 0
      %p46 = por %p44, %p45
      %p47 = scmp.ne.s32.totalorder %s36, %s39
      %p48 = scmp.eq.s32.totalorder %s17, 3
      %p49 = por %p47, %p48
      %p50 = scmp.ne.s32.totalorder %s39, %s40
      %p51 = scmp.eq.s32.totalorder %s17, 0
      %p52 = por %p50, %p51
      %p53 = scmp.ne.s32.totalorder %s39, %s40
      %p54 = scmp.eq.s32.totalorder %s18, 3
      %p55 = por %p53, %p54
      %p57 = scmp.ne.s32.totalorder %s40, %s56
      %p58 = scmp.eq.s32.totalorder %s18, 0
      %p59 = por %p57, %p58
      %s61 = sadd.s32 %s60, 1
      %p64 = scmp.eq.s32.totalorder %s12, 3
      %p65 = scmp.ne.s32.totalorder %s60, %s62
      %p66 = scmp.eq.s32.totalorder %s12, 0
      %p67 = por %p65, %p66
      %p68 = scmp.ne.s32.totalorder %s60, %s62
      %p69 = scmp.eq.s32.totalorder %s17, 3
      %p70 = por %p68, %p69
      %p71 = scmp.ne.s32.totalorder %s62, %s63
      %p72 = scmp.eq.s32.totalorder %s17, 0
      %p73 = por %p71, %p72
      %p74 = scmp.ne.s32.totalorder %s62, %s63
      %p75 = scmp.eq.s32.totalorder %s18, 3
      %p76 = por %p74, %p75
      %p78 = scmp.ne.s32.totalorder %s63, %s77
      %p79 = scmp.eq.s32.totalorder %s18, 0
      %p80 = por %p78, %p79
      %s82 = sadd.s32 %s81, 1
      %p85 = scmp.eq.s32.totalorder %s12, 3
      %p86 = scmp.ne.s32.totalorder %s81, %s83
      %p87 = scmp.eq.s32.totalorder %s12, 0
      %p88 = por %p86, %p87
      %p89 = scmp.ne.s32.totalorder %s81, %s83
      %p90 = scmp.eq.s32.totalorder %s17, 3
      %p91 = por %p89, %p90
      %p92 = scmp.ne.s32.totalorder %s83, %s84
      %p93 = scmp.eq.s32.totalorder %s17, 0
      %p94 = por %p92, %p93
      %p95 = scmp.ne.s32.totalorder %s83, %s84
      %p96 = scmp.eq.s32.totalorder %s18, 3
      %p97 = por %p95, %p96
      %p99 = scmp.ne.s32.totalorder %s84, %s98
      %p100 = scmp.eq.s32.totalorder %s18, 0
      %p101 = por %p99, %p100
      %s102 = ssub.s32 %s19, %s31
      %s103 = ssub.s32 %s20, %s27
      %s104 = sor.u32 %s102, %s103
      %p105 = scmp.eq.s32.totalorder %s104, 0
      %s107 = sadd.s32 %s106, 1
      %s108 = scalar_select %p105, %s106, %s107
      %p111 = pneg %p105
      %p112 = scmp.eq.s32.totalorder %s12, 3
      %p113 = por %p111, %p112
      %p114 = scmp.ne.s32.totalorder %s106, %s109
      %p115 = scmp.eq.s32.totalorder %s12, 0
      %p116 = por %p114, %p115
      %p117 = scmp.ne.s32.totalorder %s106, %s109
      %p118 = scmp.eq.s32.totalorder %s17, 3
      %p119 = por %p117, %p118
      %p120 = scmp.ne.s32.totalorder %s109, %s110
      %p121 = scmp.eq.s32.totalorder %s17, 0
      %p122 = por %p120, %p121
      %p123 = scmp.ne.s32.totalorder %s109, %s110
      %p124 = scmp.eq.s32.totalorder %s18, 3
      %p125 = por %p123, %p124
      %p127 = scmp.ne.s32.totalorder %s110, %s126
      %p128 = scmp.eq.s32.totalorder %s18, 0
      %p129 = por %p127, %p128
      %p130 = scmp.le.s32.totalorder 1, %s12
      %p131 = scmp.lt.s32.totalorder %s12, 5
      %p132 = pnand %p130, %p131
      %p133 = pneg %p132
      // Predicated region
      $region9: #{tpu_custom_call.1} parent=5 // pred_check
        _
      $region10: #{tpu_custom_call.1} parent=5 // pred_check_branch
        %135 = sbr.rel (%p132) target = $region12
      $region11: #{tpu_custom_call.1} parent=5 // pred_region
        %s136 = ssub.s32 %s12, 1
        // Predicated region
        $region13: #{tpu_custom_call.1} parent=11 // pred_check
          %p137 = pneg %p73
        $region14: #{tpu_custom_call.1} parent=11 // pred_check_branch
          %139 = sbr.rel (%p137) target = $region16
        $region15: #{tpu_custom_call.1} parent=11 // pred_region
          _
        $region16: #{tpu_custom_call.1} parent=11 // pred_fallthru
          _
        // Predicated region
        $region17: #{tpu_custom_call.1} parent=11 // pred_check
          %p140 = pneg %p94
        $region18: #{tpu_custom_call.1} parent=11 // pred_check_branch
          %142 = sbr.rel (%p140) target = $region20
        $region19: #{tpu_custom_call.1} parent=11 // pred_region
          _
        $region20: #{tpu_custom_call.1} parent=11 // pred_fallthru
          _
      $region12: #{tpu_custom_call.1} parent=5 // pred_fallthru
        _
      %p143 = scmp.lt.s32.totalorder %s12, 4
      // Predicated region
      $region21: #{tpu_custom_call.1} parent=5 // pred_check
        %p144 = pneg %p143
      $region22: #{tpu_custom_call.1} parent=5 // pred_check_branch
        %146 = sbr.rel (%p144) target = $region24
      $region23: #{tpu_custom_call.1} parent=5 // pred_region
        // Predicated region
        $region25: #{tpu_custom_call.1} parent=23 // pred_check
          %p147 = pneg %p46
        $region26: #{tpu_custom_call.1} parent=23 // pred_check_branch
          %149 = sbr.rel (%p147) target = $region28
        $region27: #{tpu_custom_call.1} parent=23 // pred_region
          %p150 = scmp.lt.s32.totalorder %s19, 1
          %s151 = scalar_select %p150, %s19, 1
          %p152 = scmp.lt.s32.totalorder %s20, 1
          %s153 = scalar_select %p152, %s20, 1
          %s154 = smul.addr %s151, 2
          %s155 = sadd.s32 %s153, %s154
          %s156 = smul.addr %s155, 4
          %s157 = scalar_lea.vmem %s0, %s156
        $region28: #{tpu_custom_call.1} parent=23 // pred_fallthru
          _
      $region24: #{tpu_custom_call.1} parent=5 // pred_fallthru
        _
      %p158 = scmp.le.s32.totalorder 1, %s12
      %p159 = scmp.lt.s32.totalorder %s12, 5
      %p160 = pnand %p158, %p159
      %p161 = pneg %p160
      // Predicated region
      $region29: #{tpu_custom_call.1} parent=5 // pred_check
        _
      $region30: #{tpu_custom_call.1} parent=5 // pred_check_branch
        %163 = sbr.rel (%p160) target = $region32
      $region31: #{tpu_custom_call.1} parent=5 // pred_region
        %s164 = ssub.s32 %s12, 1
        %p165 = scmp.lt.s32.totalorder %s21, 1
        %s166 = scalar_select %p165, %s21, 1
        %p167 = scmp.lt.s32.totalorder %s22, 1
        %s168 = scalar_select %p167, %s22, 1
        %s169 = smul.addr %s166, 2
        %s170 = sadd.s32 %s168, %s169
        %s171 = smul.addr %s170, 4
        %s172 = scalar_lea.vmem %s0, %s171
        %p173 = pneg %p52
        %p174 = pneg %p49
        %p175 = pneg %p73
        %p176 = pneg %p70
        %p177 = pneg %p94
        %p178 = pneg %p91
        %p179 = pneg %p122
        %p180 = pneg %p119
        %s181 = sand.u32 %s109, 1
        %s182 = scalar_lea.sflag [#allocation3], %s181
        %s183 = sand.u32 %s109, 1
        %s184 = smul.addr %s183, 8
        %s185 = scalar_lea.vmem [#allocation2], %s184
        %p186 = scmp.lt.s32.totalorder %s21, 1
        %s187 = scalar_select %p186, %s21, 1
        %p188 = scmp.lt.s32.totalorder %s22, 1
        %s189 = scalar_select %p188, %s22, 1
        %s190 = smul.addr %s187, 2
        %s191 = sadd.s32 %s189, %s190
        %s192 = smul.addr %s191, 4
        %s193 = scalar_lea.vmem %s0, %s192
        %v194 = vld [vmem:[%s1] sm:$0xff]
        %v195 = vld [vmem:[%s2] sm:$0xff]
        %v196 = vld [vmem:[%s193] sm:$0xf]
        %198 = vset.pattern.permute.xlu0 0
        %199 = vperm.xlu0 %198, %v195
        %v200 = vpop.permute.xlu0 %199
        %vm202 = vcmask 31744
        %v204 = vsel %vm202, %v194, 0
        %vm206 = vcmask 1043456
        %v208 = vsel %vm206, %v196, 0
        %210 = vmatprep.subr.mxu0 0.0
        %211 = vmatpush1.msra.mxu0 %v208
        %212 = vmatprep.subr.mxu0 0.0
        %213 = vmatpush1.msra.mxu0 0.0
        %214 = vmatprep.subr.mxu0 0.0
        %215 = vmatpush1.msra.mxu0 0.0
        %216 = vmatprep.subr.mxu0 0.0
        %217 = vmatpush1.msra.mxu0 0.0
        %218 = vmatprep.subr.mxu0 0.0
        %219 = vmatpush1.msra.mxu0 0.0
        %220 = vmatprep.subr.mxu0 0.0
        %221 = vmatpush1.msra.mxu0 0.0
        %222 = vmatprep.subr.mxu0 0.0
        %223 = vmatpush1.msra.mxu0 0.0
        %224 = vmatprep.subr.mxu0 0.0
        %225 = vmatpush1.msra.mxu0 0.0
        %226 = vmatprep.subr.mxu0 0.0
        %227 = vmatpush1.msra.mxu0 0.0
        %228 = vmatprep.subr.mxu0 0.0
        %229 = vmatpush1.msra.mxu0 0.0
        %230 = vmatprep.subr.mxu0 0.0
        %231 = vmatpush1.msra.mxu0 0.0
        %232 = vmatprep.subr.mxu0 0.0
        %233 = vmatpush1.msra.mxu0 0.0
        %234 = vmatprep.subr.mxu0 0.0
        %235 = vmatpush1.msra.mxu0 0.0
        %236 = vmatprep.subr.mxu0 0.0
        %237 = vmatpush1.msra.mxu0 0.0
        %238 = vmatprep.subr.mxu0 0.0
        %239 = vmatpush1.msra.mxu0 0.0
        %240 = vmatprep.subr.mxu0 0.0
        %241 = vmatpush1.msra.mxu0 0.0
        %242 = vmatprep.subr.mxu0 0.0
        %243 = vmatpush1.msra.mxu0 0.0
        %244 = vmatprep.subr.mxu0 0.0
        %245 = vmatpush1.msra.mxu0 0.0
        %246 = vmatprep.subr.mxu0 0.0
        %247 = vmatpush1.msra.mxu0 0.0
        %248 = vmatprep.subr.mxu0 0.0
        %249 = vmatpush1.msra.mxu0 0.0
        %250 = vmatprep.subr.mxu0 0.0
        %251 = vmatpush1.msra.mxu0 0.0
        %252 = vmatprep.subr.mxu0 0.0
        %253 = vmatpush1.msra.mxu0 0.0
        %254 = vmatprep.subr.mxu0 0.0
        %255 = vmatpush1.msra.mxu0 0.0
        %256 = vmatprep.subr.mxu0 0.0
        %257 = vmatpush1.msra.mxu0 0.0
        %258 = vmatprep.subr.mxu0 0.0
        %259 = vmatpush1.msra.mxu0 0.0
        %260 = vmatprep.subr.mxu0 0.0
        %261 = vmatpush1.msra.mxu0 0.0
        %262 = vmatprep.subr.mxu0 0.0
        %263 = vmatpush1.msra.mxu0 0.0
        %264 = vmatprep.subr.mxu0 0.0
        %265 = vmatpush1.msra.mxu0 0.0
        %266 = vmatprep.subr.mxu0 0.0
        %267 = vmatpush1.msra.mxu0 0.0
        %268 = vmatprep.subr.mxu0 0.0
        %269 = vmatpush1.msra.mxu0 0.0
        %270 = vmatprep.subr.mxu0 0.0
        %271 = vmatpush1.msra.mxu0 0.0
        %272 = vmatprep.subr.mxu0 0.0
        %273 = vmatpush1.msra.mxu0 0.0
        %274 = vmatprep.mubr.f32.mxu0 0.0
        %275 = vmatmul.mubr.f32.gmra.mrb[0].mxu0 %v204
        %v276 = vpop.f32.mrb[0].mxu0
        %v277 = vadd.f32 %v200, %v276
        %v278 = vpop.f32.mrb[0].mxu0
        %279 = vdwg.mxu0
        %280 = vst [vmem:[%s185] sm:$0xff] %v277
        %s281 = sand.u32 %s109, 1
        %s282 = scalar_lea.sflag [#allocation3], %s281
        %s283 = sand.u32 %s109, 1
        %s284 = smul.addr %s283, 8
        %s285 = scalar_lea.vmem [#allocation2], %s284
        // Predicated region
        $region33: #{tpu_custom_call.1} parent=31 // pred_check
          %p286 = pneg %p119
        $region34: #{tpu_custom_call.1} parent=31 // pred_check_branch
          %288 = sbr.rel (%p286) target = $region36
        $region35: #{tpu_custom_call.1} parent=31 // pred_region
          %s290 = ssub.s32 128, 128
          %291 = vsyncadd %s282, %s290
          %s292 = smul.addr %s21, 2
          %s293 = sadd.s32 %s22, %s292
          %s294 = smul.addr %s293, 128
          %s295 = scalar_lea.hbm %s3, %s294
          %s297 = sshll.u32 %s285, 4
          %s298 = int_to_ptr.vmem [resolvable:$true] %s297
          %300 = dma.vmem_to_hbm [thread:$0]  %s298, 128, %s295, %s282
        $region36: #{tpu_custom_call.1} parent=31 // pred_fallthru
          _
      $region32: #{tpu_custom_call.1} parent=5 // pred_fallthru
        _
      %p301 = scmp.le.s32.totalorder 2, %s12
      // Predicated region
      $region37: #{tpu_custom_call.1} parent=5 // pred_check
        %p302 = pneg %p301
      $region38: #{tpu_custom_call.1} parent=5 // pred_check_branch
        %304 = sbr.rel (%p302) target = $region40
      $region39: #{tpu_custom_call.1} parent=5 // pred_region
        %s305 = ssub.s32 %s12, 2
        // Predicated region
        $region41: #{tpu_custom_call.1} parent=39 // pred_check
          %p306 = pneg %p125
        $region42: #{tpu_custom_call.1} parent=39 // pred_check_branch
          %308 = sbr.rel (%p306) target = $region44
        $region43: #{tpu_custom_call.1} parent=39 // pred_region
          %s309 = sand.u32 %s110, 1
          %s310 = scalar_lea.sflag [#allocation3], %s309
          %s311 = sand.u32 %s110, 1
          %s312 = smul.addr %s311, 8
          %s313 = scalar_lea.vmem [#allocation2], %s312
          %314 = dma.done %s310, 128
        $region44: #{tpu_custom_call.1} parent=39 // pred_fallthru
          _
      $region40: #{tpu_custom_call.1} parent=5 // pred_fallthru
        _
    $region6: #{tpu_custom_call.1} parent=1 // loop_footer
      %s16 = sadd.s32 1, %s12
    $region7: #{tpu_custom_call.1} parent=1 // loop_footer_branch
      %11 = sbr.rel target = $region3
    $region8: #{tpu_custom_call.1} parent=1 // loop_exit
      _
    %315 = vsyncpa [#allocation3], 1
    %s316 = scalar_lea.sflag [#allocation3], 1
    %317 = vsyncpa %s316, 1

</llo_original>
